<compile_context>
chip_gen: v7x
topology: tpu7x:2x2x1
jax: 0.10.0
libtpu: 0.0.40
codegen_flags: <defaults>
</compile_context>

<pallas_src>
import functools

import jax
import jax.numpy as jnp
from jax.experimental import pallas as pl
from jax.experimental.pallas import tpu as pltpu


def _round_up(x, m):
    return ((x + m - 1) // m) * m


def _double_conv_kernel(shifts, x_ref, w1_ref, t1_ref, w2_ref, t2_ref,
                        m_ref, o_ref):
    """Fused (conv3x3 -> BN -> ReLU) x 2 for one batch tile.

    x_ref : (B_TILE, Cin_p, S)   flattened NCHW images, S = H*W (lane-dense)
    w1_ref: (Cmid_p, 9*Cin_p)    conv1 weights (BN1 scale folded in), bf16
    t1_ref: (Cmid_p, 1)          BN1 shift (f32)
    w2_ref: (Cout_p, 9*Cmid_p)   conv2 weights (BN2 scale folded in), bf16
    t2_ref: (Cout_p, 1)          BN2 shift (f32)
    m_ref : (9, 1, S)            0/1 validity mask per tap (zero padding)
    o_ref : (B_TILE, Cout_p, S)
    """
    f32 = jnp.float32
    bf16 = jnp.bfloat16

    def stack9(x_cs):
        # x_cs: (C, S) f32 -> (9*C, S) f32 tap stack.  K-order = tap-major,
        # channel-minor, matching the wrapper's weight flattening.
        parts = []
        for t, shift in enumerate(shifts):
            if shift == 0:                    # center tap: no shift, all valid
                parts.append(x_cs)
            else:
                parts.append(pltpu.roll(x_cs, shift=shift, axis=1) * m_ref[t])
        return jnp.concatenate(parts, axis=0)

    b_tile = x_ref.shape[0]
    for b in range(b_tile):                                   # static unroll
        x = x_ref[b].astype(f32)                              # (Cin_p, S)
        p1 = stack9(x).astype(bf16)                           # (9*Cin_p, S)
        y1 = jnp.dot(w1_ref[...], p1,
                     preferred_element_type=f32)              # (Cmid_p, S)
        y1 = jnp.maximum(y1 + t1_ref[...], 0.0)               # BN1 shift+ReLU
        p2 = stack9(y1).astype(bf16)                          # (9*Cmid_p, S)
        y2 = jnp.dot(w2_ref[...], p2,
                     preferred_element_type=f32)              # (Cout_p, S)
        y2 = jnp.maximum(y2 + t2_ref[...], 0.0)               # BN2 shift+ReLU
        o_ref[b] = y2.astype(o_ref.dtype)


def double_conv(x, w1, gamma1, beta1, mean1, var1,
                w2, gamma2, beta2, mean2, var2, *, eps=1e-5, b_tile=None):
    """DoubleConv forward (inference-mode BatchNorm), NCHW in / NCHW out.

    x : (N, Cin, H, W); w1: (Cmid, Cin, 3, 3); w2: (Cout, Cmid, 3, 3)
    """
    N, Cin, H, W = x.shape
    Cmid = w1.shape[0]
    Cout = w2.shape[0]
    S = H * W
    f32 = jnp.float32

    if b_tile is None:
        # Largest small divisor of N: amortizes per-grid-step overhead while
        # keeping the per-step VMEM footprint bounded.
        b_tile = next(c for c in (4, 2, 1) if N % c == 0)
    if N % b_tile != 0:
        raise ValueError(f"b_tile={b_tile} must divide N={N}")

    # Pad channel counts up to multiples of 8 (sublane-aligned tiles).  Padded
    # weight rows/cols and BN shifts are zero, so padded channels stay zero.
    Cin_p = _round_up(Cin, 8)
    Cmid_p = _round_up(Cmid, 8)
    Cout_p = _round_up(Cout, 8)

    # Free reshape of the contiguous NCHW buffer; channel pad (if any) is a
    # single small XLA copy in HBM.
    x_flat = x.reshape(N, Cin, S)
    if Cin_p != Cin:
        x_flat = jnp.pad(x_flat, ((0, 0), (0, Cin_p - Cin), (0, 0)))

    def fold(w, gamma, beta, mean, var, cout, cin, cout_p, cin_p):
        # Fold BN (inference) scale into the conv weights; keep shift separate.
        scale = gamma.astype(f32) / jnp.sqrt(var.astype(f32) + eps)
        shift = beta.astype(f32) - mean.astype(f32) * scale
        w_s = w.astype(f32) * scale[:, None, None, None]      # (O, I, 3, 3)
        w_s = jnp.pad(w_s, ((0, cout_p - cout), (0, cin_p - cin),
                            (0, 0), (0, 0)))
        # (O,I,KH,KW) -> (O,KH,KW,I) -> (O, 9*I); K-index = (3*kh+kw)*I + i,
        # matching the in-kernel tap-stack order.
        w_flat = jnp.transpose(w_s, (0, 2, 3, 1)).reshape(cout_p, 9 * cin_p)
        shift_p = jnp.pad(shift, (0, cout_p - cout)).reshape(cout_p, 1)
        return w_flat.astype(jnp.bfloat16), shift_p

    w1_flat, t1 = fold(w1, gamma1, beta1, mean1, var1, Cmid, Cin, Cmid_p, Cin_p)
    w2_flat, t2 = fold(w2, gamma2, beta2, mean2, var2, Cout, Cmid, Cout_p, Cmid_p)

    # Per-tap lane shifts (static python ints) and 0/1 boundary masks for the
    # implicit zero padding.  Masks are tiny (9*S floats) and VMEM-resident.
    idx = jnp.arange(S, dtype=jnp.int32)
    row, col = idx // W, idx % W
    shifts, masks = [], []
    for dy in (-1, 0, 1):
        for dx in (-1, 0, 1):
            shifts.append((-(dy * W + dx)) % S)
            valid = ((row + dy >= 0) & (row + dy < H) &
                     (col + dx >= 0) & (col + dx < W))
            masks.append(valid)
    masks = jnp.stack(masks).astype(f32).reshape(9, 1, S)

    # Rough per-step resident-set estimate -> explicit scoped-VMEM limit.
    act = 4 * b_tile * S * (Cin_p + Cout_p) * 2                 # x/out (x2 bufs)
    tmp = 4 * b_tile * S * (9 * Cin_p + 9 * Cmid_p + Cmid_p + Cout_p)
    wgt = 2 * (2 * 9 * (Cmid_p * Cin_p + Cout_p * Cmid_p)
               + 4 * 9 * S + 4 * (Cmid_p + Cout_p))
    vmem_limit = int(min(100 * 2**20, max(32 * 2**20, 2 * (act + tmp + wgt))))

    out_flat = pl.pallas_call(
        functools.partial(_double_conv_kernel, tuple(shifts)),
        out_shape=jax.ShapeDtypeStruct((N, Cout_p, S), x.dtype),
        grid_spec=pltpu.PrefetchScalarGridSpec(
            num_scalar_prefetch=0,
            grid=(N // b_tile,),
            in_specs=[
                pl.BlockSpec((b_tile, Cin_p, S), lambda n: (n, 0, 0)),
                pl.BlockSpec((Cmid_p, 9 * Cin_p), lambda n: (0, 0)),
                pl.BlockSpec((Cmid_p, 1), lambda n: (0, 0)),
                pl.BlockSpec((Cout_p, 9 * Cmid_p), lambda n: (0, 0)),
                pl.BlockSpec((Cout_p, 1), lambda n: (0, 0)),
                pl.BlockSpec((9, 1, S), lambda n: (0, 0, 0)),
            ],
            out_specs=pl.BlockSpec((b_tile, Cout_p, S), lambda n: (n, 0, 0)),
        ),
        compiler_params=pltpu.CompilerParams(
            dimension_semantics=("parallel",),
            vmem_limit_bytes=vmem_limit),
    )(x_flat, w1_flat, t1, w2_flat, t2, masks)

    return out_flat[:, :Cout, :].reshape(N, Cout, H, W)


def init_double_conv_params(key, in_channels, out_channels, mid_channels=None,
                            dtype=jnp.float32):
    """Deterministic params matching the PyTorch module's shapes."""
    if mid_channels is None:
        mid_channels = out_channels
    keys = jax.random.split(key, 10)

    def conv_w(k, cout, cin):
        bound = 1.0 / (cin * 9) ** 0.5           # kaiming-uniform-ish
        return jax.random.uniform(k, (cout, cin, 3, 3), dtype, -bound, bound)

    def bn(kg, kb, km, kv, c):
        gamma = jax.random.uniform(kg, (c,), dtype, 0.5, 1.5)
        beta = jax.random.uniform(kb, (c,), dtype, -0.5, 0.5)
        mean = 0.1 * jax.random.normal(km, (c,), dtype)
        var = jax.random.uniform(kv, (c,), dtype, 0.5, 1.5)
        return gamma, beta, mean, var

    w1 = conv_w(keys[0], mid_channels, in_channels)
    w2 = conv_w(keys[1], out_channels, mid_channels)
    bn1 = bn(keys[2], keys[3], keys[4], keys[5], mid_channels)
    bn2 = bn(keys[6], keys[7], keys[8], keys[9], out_channels)
    return w1, bn1, w2, bn2


def _reference_double_conv(x, w1, bn1, w2, bn2, eps=1e-5):
    """Plain-JAX f32 reference: conv3x3 -> BN(eval) -> ReLU, twice."""
    def conv(h, w):
        return jax.lax.conv_general_dilated(
            h, w, window_strides=(1, 1), padding=((1, 1), (1, 1)),
            dimension_numbers=("NCHW", "OIHW", "NCHW"))

    def bn_relu(y, params):
        gamma, beta, mean, var = params
        y = (y - mean[None, :, None, None]) \
            * jax.lax.rsqrt(var + eps)[None, :, None, None]
        y = y * gamma[None, :, None, None] + beta[None, :, None, None]
        return jnp.maximum(y, 0.0)

    return bn_relu(conv(bn_relu(conv(x, w1), bn1), w2), bn2)


if __name__ == "__main__":
    key = jax.random.PRNGKey(0)
    k_x, k_p = jax.random.split(key)

    N, Cin, H, W = 2, 4, 16, 16
    Cout = 8                                   # mid_channels defaults to Cout

    x = jax.random.normal(k_x, (N, Cin, H, W), dtype=jnp.float32)
    w1, bn1, w2, bn2 = init_double_conv_params(k_p, Cin, Cout)

    out = double_conv(x, w1, *bn1, w2, *bn2)
    out = jax.block_until_ready(out)

    ref = _reference_double_conv(x, w1, bn1, w2, bn2)
    assert out.shape == (N, Cout, H, W), out.shape
    # bf16 matmul operands (f32 accumulation) -> looser tolerance vs f32 ref.
    err = float(jnp.max(jnp.abs(out - ref)))
    assert jnp.allclose(out, ref, atol=1e-1, rtol=5e-2), err

    print("KERNEL_OK")
</pallas_src>

<mosaic_0001>
module attributes {stable_mosaic.version = 11 : i64} {
  func.func @_double_conv_kernel(%arg0: i32, %arg1: memref<2x8x256xf32, #tpu.memory_space<vmem>>, %arg2: memref<8x72xbf16, #tpu.memory_space<vmem>>, %arg3: memref<8x1xf32, #tpu.memory_space<vmem>>, %arg4: memref<8x72xbf16, #tpu.memory_space<vmem>>, %arg5: memref<8x1xf32, #tpu.memory_space<vmem>>, %arg6: memref<9x1x256xf32, #tpu.memory_space<vmem>>, %arg7: memref<2x8x256xf32, #tpu.memory_space<vmem>>) attributes {dimension_semantics = [#tpu.dimension_semantics<parallel>], iteration_bounds = array<i64: 1>, scalar_prefetch = 0 : i64, scratch_operands = 0 : i64, tpu.core_type = #tpu.core_type<tc>, window_params = [{transform_indices = @transform_0, window_bounds = array<i64: 2, 8, 256>}, {pipeline_mode = #tpu.pipeline_mode<synchronous>, transform_indices = @transform_1, window_bounds = array<i64: 8, 72>}, {pipeline_mode = #tpu.pipeline_mode<synchronous>, transform_indices = @transform_2, window_bounds = array<i64: 8, 1>}, {pipeline_mode = #tpu.pipeline_mode<synchronous>, transform_indices = @transform_3, window_bounds = array<i64: 8, 72>}, {pipeline_mode = #tpu.pipeline_mode<synchronous>, transform_indices = @transform_4, window_bounds = array<i64: 8, 1>}, {pipeline_mode = #tpu.pipeline_mode<synchronous>, transform_indices = @transform_5, window_bounds = array<i64: 9, 1, 256>}, {transform_indices = @transform_6, window_bounds = array<i64: 2, 8, 256>}]} {
    %c0 = arith.constant 0 : index
    %c0_0 = arith.constant 0 : index
    %c0_1 = arith.constant 0 : index
    %0 = vector.load %arg1[%c0, %c0_0, %c0_1] : memref<2x8x256xf32, #tpu.memory_space<vmem>>, vector<1x8x256xf32>
    %1 = vector.shape_cast %0 : vector<1x8x256xf32> to vector<8x256xf32>
    %c17_i32 = arith.constant 17 : i32
    %2 = tpu.dynamic_rotate %1 by %c17_i32 dim 1 : vector<8x256xf32>, i32 -> vector<8x256xf32>
    %c0_2 = arith.constant 0 : index
    %c0_3 = arith.constant 0 : index
    %c0_4 = arith.constant 0 : index
    %3 = vector.load %arg6[%c0_2, %c0_3, %c0_4] : memref<9x1x256xf32, #tpu.memory_space<vmem>>, vector<1x1x256xf32>
    %4 = vector.shape_cast %3 : vector<1x1x256xf32> to vector<1x256xf32>
    %5 = vector.broadcast %4 : vector<1x256xf32> to vector<8x256xf32>
    %6 = arith.mulf %2, %5 : vector<8x256xf32>
    %c16_i32 = arith.constant 16 : i32
    %7 = tpu.dynamic_rotate %1 by %c16_i32 dim 1 : vector<8x256xf32>, i32 -> vector<8x256xf32>
    %c1 = arith.constant 1 : index
    %c0_5 = arith.constant 0 : index
    %c0_6 = arith.constant 0 : index
    %8 = vector.load %arg6[%c1, %c0_5, %c0_6] : memref<9x1x256xf32, #tpu.memory_space<vmem>>, vector<1x1x256xf32>
    %9 = vector.shape_cast %8 : vector<1x1x256xf32> to vector<1x256xf32>
    %10 = vector.broadcast %9 : vector<1x256xf32> to vector<8x256xf32>
    %11 = arith.mulf %7, %10 : vector<8x256xf32>
    %c15_i32 = arith.constant 15 : i32
    %12 = tpu.dynamic_rotate %1 by %c15_i32 dim 1 : vector<8x256xf32>, i32 -> vector<8x256xf32>
    %c2 = arith.constant 2 : index
    %c0_7 = arith.constant 0 : index
    %c0_8 = arith.constant 0 : index
    %13 = vector.load %arg6[%c2, %c0_7, %c0_8] : memref<9x1x256xf32, #tpu.memory_space<vmem>>, vector<1x1x256xf32>
    %14 = vector.shape_cast %13 : vector<1x1x256xf32> to vector<1x256xf32>
    %15 = vector.broadcast %14 : vector<1x256xf32> to vector<8x256xf32>
    %16 = arith.mulf %12, %15 : vector<8x256xf32>
    %c1_i32 = arith.constant 1 : i32
    %17 = tpu.dynamic_rotate %1 by %c1_i32 dim 1 : vector<8x256xf32>, i32 -> vector<8x256xf32>
    %c3 = arith.constant 3 : index
    %c0_9 = arith.constant 0 : index
    %c0_10 = arith.constant 0 : index
    %18 = vector.load %arg6[%c3, %c0_9, %c0_10] : memref<9x1x256xf32, #tpu.memory_space<vmem>>, vector<1x1x256xf32>
    %19 = vector.shape_cast %18 : vector<1x1x256xf32> to vector<1x256xf32>
    %20 = vector.broadcast %19 : vector<1x256xf32> to vector<8x256xf32>
    %21 = arith.mulf %17, %20 : vector<8x256xf32>
    %c255_i32 = arith.constant 255 : i32
    %22 = tpu.dynamic_rotate %1 by %c255_i32 dim 1 : vector<8x256xf32>, i32 -> vector<8x256xf32>
    %c5 = arith.constant 5 : index
    %c0_11 = arith.constant 0 : index
    %c0_12 = arith.constant 0 : index
    %23 = vector.load %arg6[%c5, %c0_11, %c0_12] : memref<9x1x256xf32, #tpu.memory_space<vmem>>, vector<1x1x256xf32>
    %24 = vector.shape_cast %23 : vector<1x1x256xf32> to vector<1x256xf32>
    %25 = vector.broadcast %24 : vector<1x256xf32> to vector<8x256xf32>
    %26 = arith.mulf %22, %25 : vector<8x256xf32>
    %c241_i32 = arith.constant 241 : i32
    %27 = tpu.dynamic_rotate %1 by %c241_i32 dim 1 : vector<8x256xf32>, i32 -> vector<8x256xf32>
    %c6 = arith.constant 6 : index
    %c0_13 = arith.constant 0 : index
    %c0_14 = arith.constant 0 : index
    %28 = vector.load %arg6[%c6, %c0_13, %c0_14] : memref<9x1x256xf32, #tpu.memory_space<vmem>>, vector<1x1x256xf32>
    %29 = vector.shape_cast %28 : vector<1x1x256xf32> to vector<1x256xf32>
    %30 = vector.broadcast %29 : vector<1x256xf32> to vector<8x256xf32>
    %31 = arith.mulf %27, %30 : vector<8x256xf32>
    %c240_i32 = arith.constant 240 : i32
    %32 = tpu.dynamic_rotate %1 by %c240_i32 dim 1 : vector<8x256xf32>, i32 -> vector<8x256xf32>
    %c7 = arith.constant 7 : index
    %c0_15 = arith.constant 0 : index
    %c0_16 = arith.constant 0 : index
    %33 = vector.load %arg6[%c7, %c0_15, %c0_16] : memref<9x1x256xf32, #tpu.memory_space<vmem>>, vector<1x1x256xf32>
    %34 = vector.shape_cast %33 : vector<1x1x256xf32> to vector<1x256xf32>
    %35 = vector.broadcast %34 : vector<1x256xf32> to vector<8x256xf32>
    %36 = arith.mulf %32, %35 : vector<8x256xf32>
    %c239_i32 = arith.constant 239 : i32
    %37 = tpu.dynamic_rotate %1 by %c239_i32 dim 1 : vector<8x256xf32>, i32 -> vector<8x256xf32>
    %c8 = arith.constant 8 : index
    %c0_17 = arith.constant 0 : index
    %c0_18 = arith.constant 0 : index
    %38 = vector.load %arg6[%c8, %c0_17, %c0_18] : memref<9x1x256xf32, #tpu.memory_space<vmem>>, vector<1x1x256xf32>
    %39 = vector.shape_cast %38 : vector<1x1x256xf32> to vector<1x256xf32>
    %40 = vector.broadcast %39 : vector<1x256xf32> to vector<8x256xf32>
    %41 = arith.mulf %37, %40 : vector<8x256xf32>
    %42 = tpu.concatenate %6, %11, %16, %21, %1, %26, %31, %36, %41 in 0 : vector<8x256xf32>, vector<8x256xf32>, vector<8x256xf32>, vector<8x256xf32>, vector<8x256xf32>, vector<8x256xf32>, vector<8x256xf32>, vector<8x256xf32>, vector<8x256xf32> -> vector<72x256xf32>
    %43 = arith.truncf %42 : vector<72x256xf32> to vector<72x256xbf16>
    %c0_19 = arith.constant 0 : index
    %c0_20 = arith.constant 0 : index
    %44 = vector.load %arg2[%c0_19, %c0_20] : memref<8x72xbf16, #tpu.memory_space<vmem>>, vector<8x72xbf16>
    %cst = arith.constant dense<0.000000e+00> : vector<8x256xf32>
    %45 = tpu.matmul %44, %43, %cst {dimension_numbers = #tpu.dot_dimension_numbers<[1], [0], [0], [1], [0, 0, 1, 1], [], []>} : vector<8x72xbf16>, vector<72x256xbf16>, vector<8x256xf32> -> vector<8x256xf32>
    %c0_21 = arith.constant 0 : index
    %c0_22 = arith.constant 0 : index
    %46 = vector.load %arg3[%c0_21, %c0_22] : memref<8x1xf32, #tpu.memory_space<vmem>>, vector<8x1xf32>
    %47 = vector.broadcast %46 : vector<8x1xf32> to vector<8x256xf32>
    %48 = arith.addf %45, %47 : vector<8x256xf32>
    %cst_23 = arith.constant 0.000000e+00 : f32
    %49 = vector.broadcast %cst_23 : f32 to vector<8x256xf32>
    %50 = arith.maximumf %48, %49 : vector<8x256xf32>
    %c17_i32_24 = arith.constant 17 : i32
    %51 = tpu.dynamic_rotate %50 by %c17_i32_24 dim 1 : vector<8x256xf32>, i32 -> vector<8x256xf32>
    %c0_25 = arith.constant 0 : index
    %c0_26 = arith.constant 0 : index
    %c0_27 = arith.constant 0 : index
    %52 = vector.load %arg6[%c0_25, %c0_26, %c0_27] : memref<9x1x256xf32, #tpu.memory_space<vmem>>, vector<1x1x256xf32>
    %53 = vector.shape_cast %52 : vector<1x1x256xf32> to vector<1x256xf32>
    %54 = vector.broadcast %53 : vector<1x256xf32> to vector<8x256xf32>
    %55 = arith.mulf %51, %54 : vector<8x256xf32>
    %c16_i32_28 = arith.constant 16 : i32
    %56 = tpu.dynamic_rotate %50 by %c16_i32_28 dim 1 : vector<8x256xf32>, i32 -> vector<8x256xf32>
    %c1_29 = arith.constant 1 : index
    %c0_30 = arith.constant 0 : index
    %c0_31 = arith.constant 0 : index
    %57 = vector.load %arg6[%c1_29, %c0_30, %c0_31] : memref<9x1x256xf32, #tpu.memory_space<vmem>>, vector<1x1x256xf32>
    %58 = vector.shape_cast %57 : vector<1x1x256xf32> to vector<1x256xf32>
    %59 = vector.broadcast %58 : vector<1x256xf32> to vector<8x256xf32>
    %60 = arith.mulf %56, %59 : vector<8x256xf32>
    %c15_i32_32 = arith.constant 15 : i32
    %61 = tpu.dynamic_rotate %50 by %c15_i32_32 dim 1 : vector<8x256xf32>, i32 -> vector<8x256xf32>
    %c2_33 = arith.constant 2 : index
    %c0_34 = arith.constant 0 : index
    %c0_35 = arith.constant 0 : index
    %62 = vector.load %arg6[%c2_33, %c0_34, %c0_35] : memref<9x1x256xf32, #tpu.memory_space<vmem>>, vector<1x1x256xf32>
    %63 = vector.shape_cast %62 : vector<1x1x256xf32> to vector<1x256xf32>
    %64 = vector.broadcast %63 : vector<1x256xf32> to vector<8x256xf32>
    %65 = arith.mulf %61, %64 : vector<8x256xf32>
    %c1_i32_36 = arith.constant 1 : i32
    %66 = tpu.dynamic_rotate %50 by %c1_i32_36 dim 1 : vector<8x256xf32>, i32 -> vector<8x256xf32>
    %c3_37 = arith.constant 3 : index
    %c0_38 = arith.constant 0 : index
    %c0_39 = arith.constant 0 : index
    %67 = vector.load %arg6[%c3_37, %c0_38, %c0_39] : memref<9x1x256xf32, #tpu.memory_space<vmem>>, vector<1x1x256xf32>
    %68 = vector.shape_cast %67 : vector<1x1x256xf32> to vector<1x256xf32>
    %69 = vector.broadcast %68 : vector<1x256xf32> to vector<8x256xf32>
    %70 = arith.mulf %66, %69 : vector<8x256xf32>
    %c255_i32_40 = arith.constant 255 : i32
    %71 = tpu.dynamic_rotate %50 by %c255_i32_40 dim 1 : vector<8x256xf32>, i32 -> vector<8x256xf32>
    %c5_41 = arith.constant 5 : index
    %c0_42 = arith.constant 0 : index
    %c0_43 = arith.constant 0 : index
    %72 = vector.load %arg6[%c5_41, %c0_42, %c0_43] : memref<9x1x256xf32, #tpu.memory_space<vmem>>, vector<1x1x256xf32>
    %73 = vector.shape_cast %72 : vector<1x1x256xf32> to vector<1x256xf32>
    %74 = vector.broadcast %73 : vector<1x256xf32> to vector<8x256xf32>
    %75 = arith.mulf %71, %74 : vector<8x256xf32>
    %c241_i32_44 = arith.constant 241 : i32
    %76 = tpu.dynamic_rotate %50 by %c241_i32_44 dim 1 : vector<8x256xf32>, i32 -> vector<8x256xf32>
    %c6_45 = arith.constant 6 : index
    %c0_46 = arith.constant 0 : index
    %c0_47 = arith.constant 0 : index
    %77 = vector.load %arg6[%c6_45, %c0_46, %c0_47] : memref<9x1x256xf32, #tpu.memory_space<vmem>>, vector<1x1x256xf32>
    %78 = vector.shape_cast %77 : vector<1x1x256xf32> to vector<1x256xf32>
    %79 = vector.broadcast %78 : vector<1x256xf32> to vector<8x256xf32>
    %80 = arith.mulf %76, %79 : vector<8x256xf32>
    %c240_i32_48 = arith.constant 240 : i32
    %81 = tpu.dynamic_rotate %50 by %c240_i32_48 dim 1 : vector<8x256xf32>, i32 -> vector<8x256xf32>
    %c7_49 = arith.constant 7 : index
    %c0_50 = arith.constant 0 : index
    %c0_51 = arith.constant 0 : index
    %82 = vector.load %arg6[%c7_49, %c0_50, %c0_51] : memref<9x1x256xf32, #tpu.memory_space<vmem>>, vector<1x1x256xf32>
    %83 = vector.shape_cast %82 : vector<1x1x256xf32> to vector<1x256xf32>
    %84 = vector.broadcast %83 : vector<1x256xf32> to vector<8x256xf32>
    %85 = arith.mulf %81, %84 : vector<8x256xf32>
    %c239_i32_52 = arith.constant 239 : i32
    %86 = tpu.dynamic_rotate %50 by %c239_i32_52 dim 1 : vector<8x256xf32>, i32 -> vector<8x256xf32>
    %c8_53 = arith.constant 8 : index
    %c0_54 = arith.constant 0 : index
    %c0_55 = arith.constant 0 : index
    %87 = vector.load %arg6[%c8_53, %c0_54, %c0_55] : memref<9x1x256xf32, #tpu.memory_space<vmem>>, vector<1x1x256xf32>
    %88 = vector.shape_cast %87 : vector<1x1x256xf32> to vector<1x256xf32>
    %89 = vector.broadcast %88 : vector<1x256xf32> to vector<8x256xf32>
    %90 = arith.mulf %86, %89 : vector<8x256xf32>
    %91 = tpu.concatenate %55, %60, %65, %70, %50, %75, %80, %85, %90 in 0 : vector<8x256xf32>, vector<8x256xf32>, vector<8x256xf32>, vector<8x256xf32>, vector<8x256xf32>, vector<8x256xf32>, vector<8x256xf32>, vector<8x256xf32>, vector<8x256xf32> -> vector<72x256xf32>
    %92 = arith.truncf %91 : vector<72x256xf32> to vector<72x256xbf16>
    %c0_56 = arith.constant 0 : index
    %c0_57 = arith.constant 0 : index
    %93 = vector.load %arg4[%c0_56, %c0_57] : memref<8x72xbf16, #tpu.memory_space<vmem>>, vector<8x72xbf16>
    %cst_58 = arith.constant dense<0.000000e+00> : vector<8x256xf32>
    %94 = tpu.matmul %93, %92, %cst_58 {dimension_numbers = #tpu.dot_dimension_numbers<[1], [0], [0], [1], [0, 0, 1, 1], [], []>} : vector<8x72xbf16>, vector<72x256xbf16>, vector<8x256xf32> -> vector<8x256xf32>
    %c0_59 = arith.constant 0 : index
    %c0_60 = arith.constant 0 : index
    %95 = vector.load %arg5[%c0_59, %c0_60] : memref<8x1xf32, #tpu.memory_space<vmem>>, vector<8x1xf32>
    %96 = vector.broadcast %95 : vector<8x1xf32> to vector<8x256xf32>
    %97 = arith.addf %94, %96 : vector<8x256xf32>
    %cst_61 = arith.constant 0.000000e+00 : f32
    %98 = vector.broadcast %cst_61 : f32 to vector<8x256xf32>
    %99 = arith.maximumf %97, %98 : vector<8x256xf32>
    %c0_62 = arith.constant 0 : index
    %c0_63 = arith.constant 0 : index
    %c0_64 = arith.constant 0 : index
    %100 = vector.load %arg7[%c0_62, %c0_63, %c0_64] : memref<2x8x256xf32, #tpu.memory_space<vmem>>, vector<1x8x256xf32>
    %101 = vector.shape_cast %100 : vector<1x8x256xf32> to vector<8x256xf32>
    %102 = vector.shape_cast %99 : vector<8x256xf32> to vector<1x8x256xf32>
    tpu.vector_store %arg7[%c0_62, %c0_63, %c0_64], %102 {strides = array<i32>} : memref<2x8x256xf32, #tpu.memory_space<vmem>>, vector<1x8x256xf32>,
    %c1_65 = arith.constant 1 : index
    %c0_66 = arith.constant 0 : index
    %c0_67 = arith.constant 0 : index
    %103 = vector.load %arg1[%c1_65, %c0_66, %c0_67] : memref<2x8x256xf32, #tpu.memory_space<vmem>>, vector<1x8x256xf32>
    %104 = vector.shape_cast %103 : vector<1x8x256xf32> to vector<8x256xf32>
    %c17_i32_68 = arith.constant 17 : i32
    %105 = tpu.dynamic_rotate %104 by %c17_i32_68 dim 1 : vector<8x256xf32>, i32 -> vector<8x256xf32>
    %c0_69 = arith.constant 0 : index
    %c0_70 = arith.constant 0 : index
    %c0_71 = arith.constant 0 : index
    %106 = vector.load %arg6[%c0_69, %c0_70, %c0_71] : memref<9x1x256xf32, #tpu.memory_space<vmem>>, vector<1x1x256xf32>
    %107 = vector.shape_cast %106 : vector<1x1x256xf32> to vector<1x256xf32>
    %108 = vector.broadcast %107 : vector<1x256xf32> to vector<8x256xf32>
    %109 = arith.mulf %105, %108 : vector<8x256xf32>
    %c16_i32_72 = arith.constant 16 : i32
    %110 = tpu.dynamic_rotate %104 by %c16_i32_72 dim 1 : vector<8x256xf32>, i32 -> vector<8x256xf32>
    %c1_73 = arith.constant 1 : index
    %c0_74 = arith.constant 0 : index
    %c0_75 = arith.constant 0 : index
    %111 = vector.load %arg6[%c1_73, %c0_74, %c0_75] : memref<9x1x256xf32, #tpu.memory_space<vmem>>, vector<1x1x256xf32>
    %112 = vector.shape_cast %111 : vector<1x1x256xf32> to vector<1x256xf32>
    %113 = vector.broadcast %112 : vector<1x256xf32> to vector<8x256xf32>
    %114 = arith.mulf %110, %113 : vector<8x256xf32>
    %c15_i32_76 = arith.constant 15 : i32
    %115 = tpu.dynamic_rotate %104 by %c15_i32_76 dim 1 : vector<8x256xf32>, i32 -> vector<8x256xf32>
    %c2_77 = arith.constant 2 : index
    %c0_78 = arith.constant 0 : index
    %c0_79 = arith.constant 0 : index
    %116 = vector.load %arg6[%c2_77, %c0_78, %c0_79] : memref<9x1x256xf32, #tpu.memory_space<vmem>>, vector<1x1x256xf32>
    %117 = vector.shape_cast %116 : vector<1x1x256xf32> to vector<1x256xf32>
    %118 = vector.broadcast %117 : vector<1x256xf32> to vector<8x256xf32>
    %119 = arith.mulf %115, %118 : vector<8x256xf32>
    %c1_i32_80 = arith.constant 1 : i32
    %120 = tpu.dynamic_rotate %104 by %c1_i32_80 dim 1 : vector<8x256xf32>, i32 -> vector<8x256xf32>
    %c3_81 = arith.constant 3 : index
    %c0_82 = arith.constant 0 : index
    %c0_83 = arith.constant 0 : index
    %121 = vector.load %arg6[%c3_81, %c0_82, %c0_83] : memref<9x1x256xf32, #tpu.memory_space<vmem>>, vector<1x1x256xf32>
    %122 = vector.shape_cast %121 : vector<1x1x256xf32> to vector<1x256xf32>
    %123 = vector.broadcast %122 : vector<1x256xf32> to vector<8x256xf32>
    %124 = arith.mulf %120, %123 : vector<8x256xf32>
    %c255_i32_84 = arith.constant 255 : i32
    %125 = tpu.dynamic_rotate %104 by %c255_i32_84 dim 1 : vector<8x256xf32>, i32 -> vector<8x256xf32>
    %c5_85 = arith.constant 5 : index
    %c0_86 = arith.constant 0 : index
    %c0_87 = arith.constant 0 : index
    %126 = vector.load %arg6[%c5_85, %c0_86, %c0_87] : memref<9x1x256xf32, #tpu.memory_space<vmem>>, vector<1x1x256xf32>
    %127 = vector.shape_cast %126 : vector<1x1x256xf32> to vector<1x256xf32>
    %128 = vector.broadcast %127 : vector<1x256xf32> to vector<8x256xf32>
    %129 = arith.mulf %125, %128 : vector<8x256xf32>
    %c241_i32_88 = arith.constant 241 : i32
    %130 = tpu.dynamic_rotate %104 by %c241_i32_88 dim 1 : vector<8x256xf32>, i32 -> vector<8x256xf32>
    %c6_89 = arith.constant 6 : index
    %c0_90 = arith.constant 0 : index
    %c0_91 = arith.constant 0 : index
    %131 = vector.load %arg6[%c6_89, %c0_90, %c0_91] : memref<9x1x256xf32, #tpu.memory_space<vmem>>, vector<1x1x256xf32>
    %132 = vector.shape_cast %131 : vector<1x1x256xf32> to vector<1x256xf32>
    %133 = vector.broadcast %132 : vector<1x256xf32> to vector<8x256xf32>
    %134 = arith.mulf %130, %133 : vector<8x256xf32>
    %c240_i32_92 = arith.constant 240 : i32
    %135 = tpu.dynamic_rotate %104 by %c240_i32_92 dim 1 : vector<8x256xf32>, i32 -> vector<8x256xf32>
    %c7_93 = arith.constant 7 : index
    %c0_94 = arith.constant 0 : index
    %c0_95 = arith.constant 0 : index
    %136 = vector.load %arg6[%c7_93, %c0_94, %c0_95] : memref<9x1x256xf32, #tpu.memory_space<vmem>>, vector<1x1x256xf32>
    %137 = vector.shape_cast %136 : vector<1x1x256xf32> to vector<1x256xf32>
    %138 = vector.broadcast %137 : vector<1x256xf32> to vector<8x256xf32>
    %139 = arith.mulf %135, %138 : vector<8x256xf32>
    %c239_i32_96 = arith.constant 239 : i32
    %140 = tpu.dynamic_rotate %104 by %c239_i32_96 dim 1 : vector<8x256xf32>, i32 -> vector<8x256xf32>
    %c8_97 = arith.constant 8 : index
    %c0_98 = arith.constant 0 : index
    %c0_99 = arith.constant 0 : index
    %141 = vector.load %arg6[%c8_97, %c0_98, %c0_99] : memref<9x1x256xf32, #tpu.memory_space<vmem>>, vector<1x1x256xf32>
    %142 = vector.shape_cast %141 : vector<1x1x256xf32> to vector<1x256xf32>
    %143 = vector.broadcast %142 : vector<1x256xf32> to vector<8x256xf32>
    %144 = arith.mulf %140, %143 : vector<8x256xf32>
    %145 = tpu.concatenate %109, %114, %119, %124, %104, %129, %134, %139, %144 in 0 : vector<8x256xf32>, vector<8x256xf32>, vector<8x256xf32>, vector<8x256xf32>, vector<8x256xf32>, vector<8x256xf32>, vector<8x256xf32>, vector<8x256xf32>, vector<8x256xf32> -> vector<72x256xf32>
    %146 = arith.truncf %145 : vector<72x256xf32> to vector<72x256xbf16>
    %c0_100 = arith.constant 0 : index
    %c0_101 = arith.constant 0 : index
    %147 = vector.load %arg2[%c0_100, %c0_101] : memref<8x72xbf16, #tpu.memory_space<vmem>>, vector<8x72xbf16>
    %cst_102 = arith.constant dense<0.000000e+00> : vector<8x256xf32>
    %148 = tpu.matmul %147, %146, %cst_102 {dimension_numbers = #tpu.dot_dimension_numbers<[1], [0], [0], [1], [0, 0, 1, 1], [], []>} : vector<8x72xbf16>, vector<72x256xbf16>, vector<8x256xf32> -> vector<8x256xf32>
    %c0_103 = arith.constant 0 : index
    %c0_104 = arith.constant 0 : index
    %149 = vector.load %arg3[%c0_103, %c0_104] : memref<8x1xf32, #tpu.memory_space<vmem>>, vector<8x1xf32>
    %150 = vector.broadcast %149 : vector<8x1xf32> to vector<8x256xf32>
    %151 = arith.addf %148, %150 : vector<8x256xf32>
    %cst_105 = arith.constant 0.000000e+00 : f32
    %152 = vector.broadcast %cst_105 : f32 to vector<8x256xf32>
    %153 = arith.maximumf %151, %152 : vector<8x256xf32>
    %c17_i32_106 = arith.constant 17 : i32
    %154 = tpu.dynamic_rotate %153 by %c17_i32_106 dim 1 : vector<8x256xf32>, i32 -> vector<8x256xf32>
    %c0_107 = arith.constant 0 : index
    %c0_108 = arith.constant 0 : index
    %c0_109 = arith.constant 0 : index
    %155 = vector.load %arg6[%c0_107, %c0_108, %c0_109] : memref<9x1x256xf32, #tpu.memory_space<vmem>>, vector<1x1x256xf32>
    %156 = vector.shape_cast %155 : vector<1x1x256xf32> to vector<1x256xf32>
    %157 = vector.broadcast %156 : vector<1x256xf32> to vector<8x256xf32>
    %158 = arith.mulf %154, %157 : vector<8x256xf32>
    %c16_i32_110 = arith.constant 16 : i32
    %159 = tpu.dynamic_rotate %153 by %c16_i32_110 dim 1 : vector<8x256xf32>, i32 -> vector<8x256xf32>
    %c1_111 = arith.constant 1 : index
    %c0_112 = arith.constant 0 : index
    %c0_113 = arith.constant 0 : index
    %160 = vector.load %arg6[%c1_111, %c0_112, %c0_113] : memref<9x1x256xf32, #tpu.memory_space<vmem>>, vector<1x1x256xf32>
    %161 = vector.shape_cast %160 : vector<1x1x256xf32> to vector<1x256xf32>
    %162 = vector.broadcast %161 : vector<1x256xf32> to vector<8x256xf32>
    %163 = arith.mulf %159, %162 : vector<8x256xf32>
    %c15_i32_114 = arith.constant 15 : i32
    %164 = tpu.dynamic_rotate %153 by %c15_i32_114 dim 1 : vector<8x256xf32>, i32 -> vector<8x256xf32>
    %c2_115 = arith.constant 2 : index
    %c0_116 = arith.constant 0 : index
    %c0_117 = arith.constant 0 : index
    %165 = vector.load %arg6[%c2_115, %c0_116, %c0_117] : memref<9x1x256xf32, #tpu.memory_space<vmem>>, vector<1x1x256xf32>
    %166 = vector.shape_cast %165 : vector<1x1x256xf32> to vector<1x256xf32>
    %167 = vector.broadcast %166 : vector<1x256xf32> to vector<8x256xf32>
    %168 = arith.mulf %164, %167 : vector<8x256xf32>
    %c1_i32_118 = arith.constant 1 : i32
    %169 = tpu.dynamic_rotate %153 by %c1_i32_118 dim 1 : vector<8x256xf32>, i32 -> vector<8x256xf32>
    %c3_119 = arith.constant 3 : index
    %c0_120 = arith.constant 0 : index
    %c0_121 = arith.constant 0 : index
    %170 = vector.load %arg6[%c3_119, %c0_120, %c0_121] : memref<9x1x256xf32, #tpu.memory_space<vmem>>, vector<1x1x256xf32>
    %171 = vector.shape_cast %170 : vector<1x1x256xf32> to vector<1x256xf32>
    %172 = vector.broadcast %171 : vector<1x256xf32> to vector<8x256xf32>
    %173 = arith.mulf %169, %172 : vector<8x256xf32>
    %c255_i32_122 = arith.constant 255 : i32
    %174 = tpu.dynamic_rotate %153 by %c255_i32_122 dim 1 : vector<8x256xf32>, i32 -> vector<8x256xf32>
    %c5_123 = arith.constant 5 : index
    %c0_124 = arith.constant 0 : index
    %c0_125 = arith.constant 0 : index
    %175 = vector.load %arg6[%c5_123, %c0_124, %c0_125] : memref<9x1x256xf32, #tpu.memory_space<vmem>>, vector<1x1x256xf32>
    %176 = vector.shape_cast %175 : vector<1x1x256xf32> to vector<1x256xf32>
    %177 = vector.broadcast %176 : vector<1x256xf32> to vector<8x256xf32>
    %178 = arith.mulf %174, %177 : vector<8x256xf32>
    %c241_i32_126 = arith.constant 241 : i32
    %179 = tpu.dynamic_rotate %153 by %c241_i32_126 dim 1 : vector<8x256xf32>, i32 -> vector<8x256xf32>
    %c6_127 = arith.constant 6 : index
    %c0_128 = arith.constant 0 : index
    %c0_129 = arith.constant 0 : index
    %180 = vector.load %arg6[%c6_127, %c0_128, %c0_129] : memref<9x1x256xf32, #tpu.memory_space<vmem>>, vector<1x1x256xf32>
    %181 = vector.shape_cast %180 : vector<1x1x256xf32> to vector<1x256xf32>
    %182 = vector.broadcast %181 : vector<1x256xf32> to vector<8x256xf32>
    %183 = arith.mulf %179, %182 : vector<8x256xf32>
    %c240_i32_130 = arith.constant 240 : i32
    %184 = tpu.dynamic_rotate %153 by %c240_i32_130 dim 1 : vector<8x256xf32>, i32 -> vector<8x256xf32>
    %c7_131 = arith.constant 7 : index
    %c0_132 = arith.constant 0 : index
    %c0_133 = arith.constant 0 : index
    %185 = vector.load %arg6[%c7_131, %c0_132, %c0_133] : memref<9x1x256xf32, #tpu.memory_space<vmem>>, vector<1x1x256xf32>
    %186 = vector.shape_cast %185 : vector<1x1x256xf32> to vector<1x256xf32>
    %187 = vector.broadcast %186 : vector<1x256xf32> to vector<8x256xf32>
    %188 = arith.mulf %184, %187 : vector<8x256xf32>
    %c239_i32_134 = arith.constant 239 : i32
    %189 = tpu.dynamic_rotate %153 by %c239_i32_134 dim 1 : vector<8x256xf32>, i32 -> vector<8x256xf32>
    %c8_135 = arith.constant 8 : index
    %c0_136 = arith.constant 0 : index
    %c0_137 = arith.constant 0 : index
    %190 = vector.load %arg6[%c8_135, %c0_136, %c0_137] : memref<9x1x256xf32, #tpu.memory_space<vmem>>, vector<1x1x256xf32>
    %191 = vector.shape_cast %190 : vector<1x1x256xf32> to vector<1x256xf32>
    %192 = vector.broadcast %191 : vector<1x256xf32> to vector<8x256xf32>
    %193 = arith.mulf %189, %192 : vector<8x256xf32>
    %194 = tpu.concatenate %158, %163, %168, %173, %153, %178, %183, %188, %193 in 0 : vector<8x256xf32>, vector<8x256xf32>, vector<8x256xf32>, vector<8x256xf32>, vector<8x256xf32>, vector<8x256xf32>, vector<8x256xf32>, vector<8x256xf32>, vector<8x256xf32> -> vector<72x256xf32>
    %195 = arith.truncf %194 : vector<72x256xf32> to vector<72x256xbf16>
    %c0_138 = arith.constant 0 : index
    %c0_139 = arith.constant 0 : index
    %196 = vector.load %arg4[%c0_138, %c0_139] : memref<8x72xbf16, #tpu.memory_space<vmem>>, vector<8x72xbf16>
    %cst_140 = arith.constant dense<0.000000e+00> : vector<8x256xf32>
    %197 = tpu.matmul %196, %195, %cst_140 {dimension_numbers = #tpu.dot_dimension_numbers<[1], [0], [0], [1], [0, 0, 1, 1], [], []>} : vector<8x72xbf16>, vector<72x256xbf16>, vector<8x256xf32> -> vector<8x256xf32>
    %c0_141 = arith.constant 0 : index
    %c0_142 = arith.constant 0 : index
    %198 = vector.load %arg5[%c0_141, %c0_142] : memref<8x1xf32, #tpu.memory_space<vmem>>, vector<8x1xf32>
    %199 = vector.broadcast %198 : vector<8x1xf32> to vector<8x256xf32>
    %200 = arith.addf %197, %199 : vector<8x256xf32>
    %cst_143 = arith.constant 0.000000e+00 : f32
    %201 = vector.broadcast %cst_143 : f32 to vector<8x256xf32>
    %202 = arith.maximumf %200, %201 : vector<8x256xf32>
    %c1_144 = arith.constant 1 : index
    %c0_145 = arith.constant 0 : index
    %c0_146 = arith.constant 0 : index
    %203 = vector.load %arg7[%c1_144, %c0_145, %c0_146] : memref<2x8x256xf32, #tpu.memory_space<vmem>>, vector<1x8x256xf32>
    %204 = vector.shape_cast %203 : vector<1x8x256xf32> to vector<8x256xf32>
    %205 = vector.shape_cast %202 : vector<8x256xf32> to vector<1x8x256xf32>
    tpu.vector_store %arg7[%c1_144, %c0_145, %c0_146], %205 {strides = array<i32>} : memref<2x8x256xf32, #tpu.memory_space<vmem>>, vector<1x8x256xf32>,
    return
  }
  func.func @transform_0(%arg0: i32) -> (i32, i32, i32) {
    %c0_i32 = arith.constant 0 : i32
    %c0_i32_0 = arith.constant 0 : i32
    %c0_i32_1 = arith.constant 0 : i32
    return %arg0, %c0_i32, %c0_i32_0 : i32, i32, i32
  }
  func.func @transform_1(%arg0: i32) -> (i32, i32) {
    %c0_i32 = arith.constant 0 : i32
    %c0_i32_0 = arith.constant 0 : i32
    %c0_i32_1 = arith.constant 0 : i32
    return %c0_i32, %c0_i32_0 : i32, i32
  }
  func.func @transform_2(%arg0: i32) -> (i32, i32) {
    %c0_i32 = arith.constant 0 : i32
    %c0_i32_0 = arith.constant 0 : i32
    %c0_i32_1 = arith.constant 0 : i32
    return %c0_i32, %c0_i32_0 : i32, i32
  }
  func.func @transform_3(%arg0: i32) -> (i32, i32) {
    %c0_i32 = arith.constant 0 : i32
    %c0_i32_0 = arith.constant 0 : i32
    %c0_i32_1 = arith.constant 0 : i32
    return %c0_i32, %c0_i32_0 : i32, i32
  }
  func.func @transform_4(%arg0: i32) -> (i32, i32) {
    %c0_i32 = arith.constant 0 : i32
    %c0_i32_0 = arith.constant 0 : i32
    %c0_i32_1 = arith.constant 0 : i32
    return %c0_i32, %c0_i32_0 : i32, i32
  }
  func.func @transform_5(%arg0: i32) -> (i32, i32, i32) {
    %c0_i32 = arith.constant 0 : i32
    %c0_i32_0 = arith.constant 0 : i32
    %c0_i32_1 = arith.constant 0 : i32
    %c0_i32_2 = arith.constant 0 : i32
    return %c0_i32, %c0_i32_0, %c0_i32_1 : i32, i32, i32
  }
  func.func @transform_6(%arg0: i32) -> (i32, i32, i32) {
    %c0_i32 = arith.constant 0 : i32
    %c0_i32_0 = arith.constant 0 : i32
    %c0_i32_1 = arith.constant 0 : i32
    return %arg0, %c0_i32, %c0_i32_0 : i32, i32, i32
  }
}

</mosaic_0001>

<llo_original>
// kernel: tpu_custom_call.1
$region0: #{tpu_custom_call.1}
  #allocation0 [shape = 'u32[]', space=smem, size = 0x4, offset = 0x4, fixed_abs, tag = 'smem constant byte address 0x4 - core index']
  #allocation1 [shape = 'u32[144,128]{1,0:T(1,128)}', space=vmem, size = 0x12000, scoped, tag = 'internal scratch']
  %s0 = inlined_call_operand.hbm [shape: f32[2,8,256], index: 0, kind: input, shape index: {}]
  %s1 = inlined_call_operand.vmem [shape: bf16[8,72], index: 1, kind: input, shape index: {}]
  %s2 = inlined_call_operand.vmem [shape: f32[8,1], index: 2, kind: input, shape index: {}]
  %s3 = inlined_call_operand.vmem [shape: bf16[8,72], index: 3, kind: input, shape index: {}]
  %s4 = inlined_call_operand.vmem [shape: f32[8,1], index: 4, kind: input, shape index: {}]
  %s5 = inlined_call_operand.vmem [shape: f32[9,1,256], index: 5, kind: input, shape index: {}]
  %s6 = inlined_call_operand.hbm [shape: f32[2,8,256], index: 6, kind: output, shape index: {}]
  %s7 = sld [smem:[#allocation0]]
  $region38: #{tpu_custom_call.1} parent=0
    _
  %s9 = ssub.s32 1, %s7
  %s10 = scalar_select 0, %s9, %s7
  $region1: #{tpu_custom_call.1} parent=0
    #allocation2 [shape = 'u8[16384]{0}', space=vmem, size = 0x4000, scoped, tag = 'input window, operand 0, single buffered']
    #allocation3 [shape = 's32[1]{0}', space=sflag, size = 0x4, scoped, tag = 'scoped memory for tpu_custom_call.1']
    #allocation4 [shape = 's32[1]{0}', space=sflag, size = 0x4, scoped, tag = 'scoped memory for tpu_custom_call.1']
    #allocation5 [shape = 'u8[16384]{0}', space=vmem, size = 0x4000, scoped, tag = 'output window, operand 0, single buffered']
    %11 = vsyncpa [#allocation3], 0
    %12 = vsyncpa [#allocation4], 0
    // Predicated region
    $region2: #{tpu_custom_call.1} parent=1 // pred_check
      _
    $region3: #{tpu_custom_call.1} parent=1 // pred_check_branch
      %14 = sbr.rel (0) target = $region5
    $region4: #{tpu_custom_call.1} parent=1 // pred_region
      %s16 = ssub.s32 512, 512
      %17 = vsyncadd [#allocation3], %s16
      %s18 = sshll.u32 [#allocation2], 4
      %s19 = int_to_ptr.vmem [resolvable:$true] %s18
      %24 = dma.hbm_to_vmem [thread:$0]  %s0, 512, %s19, [#allocation3], 256, 256, 16
    $region5: #{tpu_custom_call.1} parent=1 // pred_fallthru
      _
    // Predicated region
    $region6: #{tpu_custom_call.1} parent=1 // pred_check
      _
    $region7: #{tpu_custom_call.1} parent=1 // pred_check_branch
      %26 = sbr.rel (0) target = $region9
    $region8: #{tpu_custom_call.1} parent=1 // pred_region
      _
    $region9: #{tpu_custom_call.1} parent=1 // pred_fallthru
      _
    // Predicated region
    $region10: #{tpu_custom_call.1} parent=1 // pred_check
      _
    $region11: #{tpu_custom_call.1} parent=1 // pred_check_branch
      %28 = sbr.rel (0) target = $region13
    $region12: #{tpu_custom_call.1} parent=1 // pred_region
      _
    $region13: #{tpu_custom_call.1} parent=1 // pred_fallthru
      _
    // Predicated region
    $region14: #{tpu_custom_call.1} parent=1 // pred_check
      _
    $region15: #{tpu_custom_call.1} parent=1 // pred_check_branch
      %30 = sbr.rel (0) target = $region17
    $region16: #{tpu_custom_call.1} parent=1 // pred_region
      _
    $region17: #{tpu_custom_call.1} parent=1 // pred_fallthru
      _
    // Predicated region
    $region18: #{tpu_custom_call.1} parent=1 // pred_check
      _
    $region19: #{tpu_custom_call.1} parent=1 // pred_check_branch
      %32 = sbr.rel (0) target = $region21
    $region20: #{tpu_custom_call.1} parent=1 // pred_region
      _
    $region21: #{tpu_custom_call.1} parent=1 // pred_fallthru
      _
    // Predicated region
    $region22: #{tpu_custom_call.1} parent=1 // pred_check
      _
    $region23: #{tpu_custom_call.1} parent=1 // pred_check_branch
      %34 = sbr.rel (0) target = $region25
    $region24: #{tpu_custom_call.1} parent=1 // pred_region
      _
    $region25: #{tpu_custom_call.1} parent=1 // pred_fallthru
      _
    // Predicated region
    $region26: #{tpu_custom_call.1} parent=1 // pred_check
      _
    $region27: #{tpu_custom_call.1} parent=1 // pred_check_branch
      %36 = sbr.rel (0) target = $region29
    $region28: #{tpu_custom_call.1} parent=1 // pred_region
      %37 = dma.done [#allocation3], 512
    $region29: #{tpu_custom_call.1} parent=1 // pred_fallthru
      _
    %v39 = vld [vmem:[#allocation2] sm:$0xff]
    %v40 = vld [vmem:[#allocation2 + $0x8] sm:$0xff]
    %41 = vrot.lane.b32.xlu0 %v39, 17
    %v42 = vpop.permute.xlu0 %41
    %43 = vrot.lane.b32.xlu0 %v40, 17
    %v44 = vpop.permute.xlu0 %43
    %v45 = vlaneseq
    %v46 = vand.u32 %v45, 127
    %vm47 = vcmp.lt.s32.totalorder %v46, 17
    %v48 = vsel %vm47, %v42, %v44
    %v49 = vsel %vm47, %v44, %v42
    %v50 = vld [vmem:[%s5] sm:$0x3]
    %v52 = vlaneseq
    %v53 = vshrl.u32 %v52, 7
    %v54 = vsub.s32 0, %v53
    %v55 = vrot.slane %v50, %v54
    %v56 = vlaneseq
    %v57 = vshrl.u32 %v56, 7
    %v58 = vsub.s32 1, %v57
    %v59 = vrot.slane %v50, %v58
    %v62 = vmul.f32 %v49, %v55
    %v63 = vmul.f32 %v48, %v59
    %64 = vrot.lane.b32.xlu0 %v39, 16
    %v65 = vpop.permute.xlu0 %64
    %66 = vrot.lane.b32.xlu0 %v40, 16
    %v67 = vpop.permute.xlu0 %66
    %vm68 = vcmp.lt.s32.totalorder %v46, 16
    %v69 = vsel %vm68, %v65, %v67
    %v70 = vsel %vm68, %v67, %v65
    %s71 = scalar_lea.vmem %s5, 2
    %v72 = vld [vmem:[%s71] sm:$0x3]
    %v74 = vlaneseq
    %v75 = vshrl.u32 %v74, 7
    %v76 = vsub.s32 0, %v75
    %v77 = vrot.slane %v72, %v76
    %v78 = vlaneseq
    %v79 = vshrl.u32 %v78, 7
    %v80 = vsub.s32 1, %v79
    %v81 = vrot.slane %v72, %v80
    %v84 = vmul.f32 %v70, %v77
    %v85 = vmul.f32 %v69, %v81
    %86 = vrot.lane.b32.xlu0 %v39, 15
    %v87 = vpop.permute.xlu0 %86
    %88 = vrot.lane.b32.xlu0 %v40, 15
    %v89 = vpop.permute.xlu0 %88
    %vm90 = vcmp.lt.s32.totalorder %v46, 15
    %v91 = vsel %vm90, %v87, %v89
    %v92 = vsel %vm90, %v89, %v87
    %s93 = scalar_lea.vmem %s5, 4
    %v94 = vld [vmem:[%s93] sm:$0x3]
    %v96 = vlaneseq
    %v97 = vshrl.u32 %v96, 7
    %v98 = vsub.s32 0, %v97
    %v99 = vrot.slane %v94, %v98
    %v100 = vlaneseq
    %v101 = vshrl.u32 %v100, 7
    %v102 = vsub.s32 1, %v101
    %v103 = vrot.slane %v94, %v102
    %v106 = vmul.f32 %v92, %v99
    %v107 = vmul.f32 %v91, %v103
    %108 = vrot.lane.b32.xlu0 %v39, 1
    %v109 = vpop.permute.xlu0 %108
    %110 = vrot.lane.b32.xlu0 %v40, 1
    %v111 = vpop.permute.xlu0 %110
    %vm112 = vcmp.lt.s32.totalorder %v46, 1
    %v113 = vsel %vm112, %v109, %v111
    %v114 = vsel %vm112, %v111, %v109
    %s115 = scalar_lea.vmem %s5, 6
    %v116 = vld [vmem:[%s115] sm:$0x3]
    %v118 = vlaneseq
    %v119 = vshrl.u32 %v118, 7
    %v120 = vsub.s32 0, %v119
    %v121 = vrot.slane %v116, %v120
    %v122 = vlaneseq
    %v123 = vshrl.u32 %v122, 7
    %v124 = vsub.s32 1, %v123
    %v125 = vrot.slane %v116, %v124
    %v128 = vmul.f32 %v114, %v121
    %v129 = vmul.f32 %v113, %v125
    %130 = vrot.lane.b32.xlu0 %v39, 127
    %v131 = vpop.permute.xlu0 %130
    %132 = vrot.lane.b32.xlu0 %v40, 127
    %v133 = vpop.permute.xlu0 %132
    %vm134 = vcmp.lt.s32.totalorder %v46, 127
    %v135 = vsel %vm134, %v131, %v133
    %v136 = vsel %vm134, %v133, %v131
    %s137 = scalar_lea.vmem %s5, 10
    %v138 = vld [vmem:[%s137] sm:$0x3]
    %v140 = vlaneseq
    %v141 = vshrl.u32 %v140, 7
    %v142 = vsub.s32 0, %v141
    %v143 = vrot.slane %v138, %v142
    %v144 = vlaneseq
    %v145 = vshrl.u32 %v144, 7
    %v146 = vsub.s32 1, %v145
    %v147 = vrot.slane %v138, %v146
    %v150 = vmul.f32 %v135, %v143
    %v151 = vmul.f32 %v136, %v147
    %152 = vrot.lane.b32.xlu0 %v39, 113
    %v153 = vpop.permute.xlu0 %152
    %154 = vrot.lane.b32.xlu0 %v40, 113
    %v155 = vpop.permute.xlu0 %154
    %vm156 = vcmp.lt.s32.totalorder %v46, 113
    %v157 = vsel %vm156, %v153, %v155
    %v158 = vsel %vm156, %v155, %v153
    %s159 = scalar_lea.vmem %s5, 12
    %v160 = vld [vmem:[%s159] sm:$0x3]
    %v162 = vlaneseq
    %v163 = vshrl.u32 %v162, 7
    %v164 = vsub.s32 0, %v163
    %v165 = vrot.slane %v160, %v164
    %v166 = vlaneseq
    %v167 = vshrl.u32 %v166, 7
    %v168 = vsub.s32 1, %v167
    %v169 = vrot.slane %v160, %v168
    %v172 = vmul.f32 %v157, %v165
    %v173 = vmul.f32 %v158, %v169
    %174 = vrot.lane.b32.xlu0 %v39, 112
    %v175 = vpop.permute.xlu0 %174
    %176 = vrot.lane.b32.xlu0 %v40, 112
    %v177 = vpop.permute.xlu0 %176
    %vm178 = vcmp.lt.s32.totalorder %v46, 112
    %v179 = vsel %vm178, %v175, %v177
    %v180 = vsel %vm178, %v177, %v175
    %s181 = scalar_lea.vmem %s5, 14
    %v182 = vld [vmem:[%s181] sm:$0x3]
    %v184 = vlaneseq
    %v185 = vshrl.u32 %v184, 7
    %v186 = vsub.s32 0, %v185
    %v187 = vrot.slane %v182, %v186
    %v188 = vlaneseq
    %v189 = vshrl.u32 %v188, 7
    %v190 = vsub.s32 1, %v189
    %v191 = vrot.slane %v182, %v190
    %v194 = vmul.f32 %v179, %v187
    %v195 = vmul.f32 %v180, %v191
    %196 = vrot.lane.b32.xlu0 %v39, 111
    %v197 = vpop.permute.xlu0 %196
    %198 = vrot.lane.b32.xlu0 %v40, 111
    %v199 = vpop.permute.xlu0 %198
    %vm200 = vcmp.lt.s32.totalorder %v46, 111
    %v201 = vsel %vm200, %v197, %v199
    %v202 = vsel %vm200, %v199, %v197
    %s203 = scalar_lea.vmem %s5, 16
    %v204 = vld [vmem:[%s203] sm:$0x3]
    %v206 = vlaneseq
    %v207 = vshrl.u32 %v206, 7
    %v208 = vsub.s32 0, %v207
    %v209 = vrot.slane %v204, %v208
    %v210 = vlaneseq
    %v211 = vshrl.u32 %v210, 7
    %v212 = vsub.s32 1, %v211
    %v213 = vrot.slane %v204, %v212
    %v216 = vmul.f32 %v201, %v209
    %v217 = vmul.f32 %v202, %v213
    %v218 = vpack.c.bf16 %v84, %v62
    %v219 = vpack.c.bf16 %v85, %v63
    %v220 = vpack.c.bf16 %v128, %v106
    %v221 = vpack.c.bf16 %v129, %v107
    %v222 = vpack.c.bf16 %v150, %v39
    %v223 = vpack.c.bf16 %v151, %v40
    %v224 = vpack.c.bf16 %v194, %v172
    %v225 = vpack.c.bf16 %v195, %v173
    %v226 = vpack.c.bf16 %v216, %v216
    %v227 = vpack.c.bf16 %v217, %v217
    %v228 = vld [vmem:[%s1] sm:$0xf]
    %v229 = vld [vmem:[%s2] sm:$0xff]
    %231 = vset.pattern.permute.xlu0 0
    %232 = vperm.xlu0 %231, %v229
    %v233 = vpop.permute.xlu0 %232
    %vm235 = vcmask 588800
    %v237 = vsel %vm235, %v228, 0
    %vm239 = vcmask 1043456
    %v241 = vsel %vm239, %v226, 0
    %v244 = vsel %vm239, %v227, 0
    %246 = vmatprep.subr.bf16.mxu0 %v219
    %247 = vmatpush1.bf16.msra.mxu0 %v218
    %248 = vmatprep.subr.bf16.mxu0 %v221
    %249 = vmatpush1.bf16.msra.mxu0 %v220
    %250 = vmatprep.subr.bf16.mxu0 %v223
    %251 = vmatpush1.bf16.msra.mxu0 %v222
    %252 = vmatprep.subr.bf16.mxu0 %v225
    %253 = vmatpush1.bf16.msra.mxu0 %v224
    %254 = vmatprep.subr.bf16.mxu0 %v244
    %255 = vmatpush1.bf16.msra.mxu0 %v241
    %256 = vmatprep.subr.bf16.mxu0 0
    %257 = vmatpush1.bf16.msra.mxu0 0
    %258 = vmatprep.subr.bf16.mxu0 0
    %259 = vmatpush1.bf16.msra.mxu0 0
    %260 = vmatprep.subr.bf16.mxu0 0
    %261 = vmatpush1.bf16.msra.mxu0 0
    %262 = vmatprep.subr.bf16.mxu0 0
    %263 = vmatpush1.bf16.msra.mxu0 0
    %264 = vmatprep.subr.bf16.mxu0 0
    %265 = vmatpush1.bf16.msra.mxu0 0
    %266 = vmatprep.subr.bf16.mxu0 0
    %267 = vmatpush1.bf16.msra.mxu0 0
    %268 = vmatprep.subr.bf16.mxu0 0
    %269 = vmatpush1.bf16.msra.mxu0 0
    %270 = vmatprep.subr.bf16.mxu0 0
    %271 = vmatpush1.bf16.msra.mxu0 0
    %272 = vmatprep.subr.bf16.mxu0 0
    %273 = vmatpush1.bf16.msra.mxu0 0
    %274 = vmatprep.subr.bf16.mxu0 0
    %275 = vmatpush1.bf16.msra.mxu0 0
    %276 = vmatprep.subr.bf16.mxu0 0
    %277 = vmatpush1.bf16.msra.mxu0 0
    %278 = vmatprep.mubr.bf16.mxu0 0
    %279 = vmatmul.mubr.bf16.gmra.mrb[0].mxu0 %v237
    %v280 = vpop.f32.mrb[0].mxu0
    %v281 = vadd.f32 %v233, %v280
    %v282 = vpop.f32.mrb[0].mxu0
    %v283 = vadd.f32 %v233, %v282
    %v284 = vpop.f32.mrb[0].mxu0
    %v285 = vpop.f32.mrb[0].mxu0
    %286 = vdwg.mxu0
    %v287 = vmax.f32 %v281, 0.0
    %v288 = vmax.f32 %v283, 0.0
    %289 = vrot.lane.b32.xlu0 %v287, 17
    %v290 = vpop.permute.xlu0 %289
    %291 = vrot.lane.b32.xlu0 %v288, 17
    %v292 = vpop.permute.xlu0 %291
    %v293 = vsel %vm47, %v290, %v292
    %v294 = vsel %vm47, %v292, %v290
    %v295 = vmul.f32 %v294, %v55
    %v296 = vmul.f32 %v293, %v59
    %297 = vrot.lane.b32.xlu0 %v287, 16
    %v298 = vpop.permute.xlu0 %297
    %299 = vrot.lane.b32.xlu0 %v288, 16
    %v300 = vpop.permute.xlu0 %299
    %v301 = vsel %vm68, %v298, %v300
    %v302 = vsel %vm68, %v300, %v298
    %v303 = vmul.f32 %v302, %v77
    %v304 = vmul.f32 %v301, %v81
    %305 = vrot.lane.b32.xlu0 %v287, 15
    %v306 = vpop.permute.xlu0 %305
    %307 = vrot.lane.b32.xlu0 %v288, 15
    %v308 = vpop.permute.xlu0 %307
    %v309 = vsel %vm90, %v306, %v308
    %v310 = vsel %vm90, %v308, %v306
    %v311 = vmul.f32 %v310, %v99
    %v312 = vmul.f32 %v309, %v103
    %313 = vrot.lane.b32.xlu0 %v287, 1
    %v314 = vpop.permute.xlu0 %313
    %315 = vrot.lane.b32.xlu0 %v288, 1
    %v316 = vpop.permute.xlu0 %315
    %v317 = vsel %vm112, %v314, %v316
    %v318 = vsel %vm112, %v316, %v314
    %v319 = vmul.f32 %v318, %v121
    %v320 = vmul.f32 %v317, %v125
    %321 = vrot.lane.b32.xlu0 %v287, 127
    %v322 = vpop.permute.xlu0 %321
    %323 = vrot.lane.b32.xlu0 %v288, 127
    %v324 = vpop.permute.xlu0 %323
    %v325 = vsel %vm134, %v322, %v324
    %v326 = vsel %vm134, %v324, %v322
    %v327 = vmul.f32 %v325, %v143
    %v328 = vmul.f32 %v326, %v147
    %329 = vrot.lane.b32.xlu0 %v287, 113
    %v330 = vpop.permute.xlu0 %329
    %331 = vrot.lane.b32.xlu0 %v288, 113
    %v332 = vpop.permute.xlu0 %331
    %v333 = vsel %vm156, %v330, %v332
    %v334 = vsel %vm156, %v332, %v330
    %v335 = vmul.f32 %v333, %v165
    %v336 = vmul.f32 %v334, %v169
    %337 = vrot.lane.b32.xlu0 %v287, 112
    %v338 = vpop.permute.xlu0 %337
    %339 = vrot.lane.b32.xlu0 %v288, 112
    %v340 = vpop.permute.xlu0 %339
    %v341 = vsel %vm178, %v338, %v340
    %v342 = vsel %vm178, %v340, %v338
    %v343 = vmul.f32 %v341, %v187
    %v344 = vmul.f32 %v342, %v191
    %345 = vrot.lane.b32.xlu0 %v287, 111
    %v346 = vpop.permute.xlu0 %345
    %347 = vrot.lane.b32.xlu0 %v288, 111
    %v348 = vpop.permute.xlu0 %347
    %v349 = vsel %vm200, %v346, %v348
    %v350 = vsel %vm200, %v348, %v346
    %v351 = vmul.f32 %v349, %v209
    %v352 = vmul.f32 %v350, %v213
    %v353 = vpack.c.bf16 %v303, %v295
    %v354 = vpack.c.bf16 %v304, %v296
    %v355 = vpack.c.bf16 %v319, %v311
    %v356 = vpack.c.bf16 %v320, %v312
    %v357 = vpack.c.bf16 %v327, %v287
    %v358 = vpack.c.bf16 %v328, %v288
    %v359 = vpack.c.bf16 %v343, %v335
    %v360 = vpack.c.bf16 %v344, %v336
    %v361 = vpack.c.bf16 %v351, %v351
    %v362 = vpack.c.bf16 %v352, %v352
    %v363 = vld [vmem:[%s3] sm:$0xf]
    %v364 = vld [vmem:[%s4] sm:$0xff]
    %366 = vset.pattern.permute.xlu0 0
    %367 = vperm.xlu0 %366, %v364
    %v368 = vpop.permute.xlu0 %367
    %v371 = vsel %vm235, %v363, 0
    %v374 = vsel %vm239, %v361, 0
    %v377 = vsel %vm239, %v362, 0
    %379 = vmatprep.subr.bf16.mxu0 %v354
    %380 = vmatpush1.bf16.msra.mxu0 %v353
    %381 = vmatprep.subr.bf16.mxu0 %v356
    %382 = vmatpush1.bf16.msra.mxu0 %v355
    %383 = vmatprep.subr.bf16.mxu0 %v358
    %384 = vmatpush1.bf16.msra.mxu0 %v357
    %385 = vmatprep.subr.bf16.mxu0 %v360
    %386 = vmatpush1.bf16.msra.mxu0 %v359
    %387 = vmatprep.subr.bf16.mxu0 %v377
    %388 = vmatpush1.bf16.msra.mxu0 %v374
    %389 = vmatprep.subr.bf16.mxu0 0
    %390 = vmatpush1.bf16.msra.mxu0 0
    %391 = vmatprep.subr.bf16.mxu0 0
    %392 = vmatpush1.bf16.msra.mxu0 0
    %393 = vmatprep.subr.bf16.mxu0 0
    %394 = vmatpush1.bf16.msra.mxu0 0
    %395 = vmatprep.subr.bf16.mxu0 0
    %396 = vmatpush1.bf16.msra.mxu0 0
    %397 = vmatprep.subr.bf16.mxu0 0
    %398 = vmatpush1.bf16.msra.mxu0 0
    %399 = vmatprep.subr.bf16.mxu0 0
    %400 = vmatpush1.bf16.msra.mxu0 0
    %401 = vmatprep.subr.bf16.mxu0 0
    %402 = vmatpush1.bf16.msra.mxu0 0
    %403 = vmatprep.subr.bf16.mxu0 0
    %404 = vmatpush1.bf16.msra.mxu0 0
    %405 = vmatprep.subr.bf16.mxu0 0
    %406 = vmatpush1.bf16.msra.mxu0 0
    %407 = vmatprep.subr.bf16.mxu0 0
    %408 = vmatpush1.bf16.msra.mxu0 0
    %409 = vmatprep.subr.bf16.mxu0 0
    %410 = vmatpush1.bf16.msra.mxu0 0
    %411 = vmatprep.mubr.bf16.mxu0 0
    %412 = vmatmul.mubr.bf16.gmra.mrb[0].mxu0 %v371
    %v413 = vpop.f32.mrb[0].mxu0
    %v414 = vadd.f32 %v368, %v413
    %v415 = vpop.f32.mrb[0].mxu0
    %v416 = vadd.f32 %v368, %v415
    %v417 = vpop.f32.mrb[0].mxu0
    %v418 = vpop.f32.mrb[0].mxu0
    %419 = vdwg.mxu0
    %v420 = vmax.f32 %v414, 0.0
    %v421 = vmax.f32 %v416, 0.0
    %422 = vst [vmem:[#allocation5] sm:$0xff] %v420
    %423 = vst [vmem:[#allocation5 + $0x8] sm:$0xff] %v421
    %s424 = scalar_lea.vmem [#allocation2], 16
    %v425 = vld [vmem:[%s424] sm:$0xff]
    %v426 = vld [vmem:[%s424 + $0x8] sm:$0xff]
    %427 = vrot.lane.b32.xlu0 %v425, 17
    %v428 = vpop.permute.xlu0 %427
    %429 = vrot.lane.b32.xlu0 %v426, 17
    %v430 = vpop.permute.xlu0 %429
    %v431 = vsel %vm47, %v428, %v430
    %v432 = vsel %vm47, %v430, %v428
    %v433 = vld [vmem:[%s5] sm:$0x3]
    %v435 = vlaneseq
    %v436 = vshrl.u32 %v435, 7
    %v437 = vsub.s32 0, %v436
    %v438 = vrot.slane %v433, %v437
    %v439 = vlaneseq
    %v440 = vshrl.u32 %v439, 7
    %v441 = vsub.s32 1, %v440
    %v442 = vrot.slane %v433, %v441
    %v445 = vmul.f32 %v432, %v438
    %v446 = vmul.f32 %v431, %v442
    %447 = vrot.lane.b32.xlu0 %v425, 16
    %v448 = vpop.permute.xlu0 %447
    %449 = vrot.lane.b32.xlu0 %v426, 16
    %v450 = vpop.permute.xlu0 %449
    %v451 = vsel %vm68, %v448, %v450
    %v452 = vsel %vm68, %v450, %v448
    %v453 = vld [vmem:[%s71] sm:$0x3]
    %v455 = vlaneseq
    %v456 = vshrl.u32 %v455, 7
    %v457 = vsub.s32 0, %v456
    %v458 = vrot.slane %v453, %v457
    %v459 = vlaneseq
    %v460 = vshrl.u32 %v459, 7
    %v461 = vsub.s32 1, %v460
    %v462 = vrot.slane %v453, %v461
    %v465 = vmul.f32 %v452, %v458
    %v466 = vmul.f32 %v451, %v462
    %467 = vrot.lane.b32.xlu0 %v425, 15
    %v468 = vpop.permute.xlu0 %467
    %469 = vrot.lane.b32.xlu0 %v426, 15
    %v470 = vpop.permute.xlu0 %469
    %v471 = vsel %vm90, %v468, %v470
    %v472 = vsel %vm90, %v470, %v468
    %v473 = vld [vmem:[%s93] sm:$0x3]
    %v475 = vlaneseq
    %v476 = vshrl.u32 %v475, 7
    %v477 = vsub.s32 0, %v476
    %v478 = vrot.slane %v473, %v477
    %v479 = vlaneseq
    %v480 = vshrl.u32 %v479, 7
    %v481 = vsub.s32 1, %v480
    %v482 = vrot.slane %v473, %v481
    %v485 = vmul.f32 %v472, %v478
    %v486 = vmul.f32 %v471, %v482
    %487 = vrot.lane.b32.xlu0 %v425, 1
    %v488 = vpop.permute.xlu0 %487
    %489 = vrot.lane.b32.xlu0 %v426, 1
    %v490 = vpop.permute.xlu0 %489
    %v491 = vsel %vm112, %v488, %v490
    %v492 = vsel %vm112, %v490, %v488
    %v493 = vld [vmem:[%s115] sm:$0x3]
    %v495 = vlaneseq
    %v496 = vshrl.u32 %v495, 7
    %v497 = vsub.s32 0, %v496
    %v498 = vrot.slane %v493, %v497
    %v499 = vlaneseq
    %v500 = vshrl.u32 %v499, 7
    %v501 = vsub.s32 1, %v500
    %v502 = vrot.slane %v493, %v501
    %v505 = vmul.f32 %v492, %v498
    %v506 = vmul.f32 %v491, %v502
    %507 = vrot.lane.b32.xlu0 %v425, 127
    %v508 = vpop.permute.xlu0 %507
    %509 = vrot.lane.b32.xlu0 %v426, 127
    %v510 = vpop.permute.xlu0 %509
    %v511 = vsel %vm134, %v508, %v510
    %v512 = vsel %vm134, %v510, %v508
    %v513 = vld [vmem:[%s137] sm:$0x3]
    %v515 = vlaneseq
    %v516 = vshrl.u32 %v515, 7
    %v517 = vsub.s32 0, %v516
    %v518 = vrot.slane %v513, %v517
    %v519 = vlaneseq
    %v520 = vshrl.u32 %v519, 7
    %v521 = vsub.s32 1, %v520
    %v522 = vrot.slane %v513, %v521
    %v525 = vmul.f32 %v511, %v518
    %v526 = vmul.f32 %v512, %v522
    %527 = vrot.lane.b32.xlu0 %v425, 113
    %v528 = vpop.permute.xlu0 %527
    %529 = vrot.lane.b32.xlu0 %v426, 113
    %v530 = vpop.permute.xlu0 %529
    %v531 = vsel %vm156, %v528, %v530
    %v532 = vsel %vm156, %v530, %v528
    %v533 = vld [vmem:[%s159] sm:$0x3]
    %v535 = vlaneseq
    %v536 = vshrl.u32 %v535, 7
    %v537 = vsub.s32 0, %v536
    %v538 = vrot.slane %v533, %v537
    %v539 = vlaneseq
    %v540 = vshrl.u32 %v539, 7
    %v541 = vsub.s32 1, %v540
    %v542 = vrot.slane %v533, %v541
    %v545 = vmul.f32 %v531, %v538
    %v546 = vmul.f32 %v532, %v542
    %547 = vrot.lane.b32.xlu0 %v425, 112
    %v548 = vpop.permute.xlu0 %547
    %549 = vrot.lane.b32.xlu0 %v426, 112
    %v550 = vpop.permute.xlu0 %549
    %v551 = vsel %vm178, %v548, %v550
    %v552 = vsel %vm178, %v550, %v548
    %v553 = vld [vmem:[%s181] sm:$0x3]
    %v555 = vlaneseq
    %v556 = vshrl.u32 %v555, 7
    %v557 = vsub.s32 0, %v556
    %v558 = vrot.slane %v553, %v557
    %v559 = vlaneseq
    %v560 = vshrl.u32 %v559, 7
    %v561 = vsub.s32 1, %v560
    %v562 = vrot.slane %v553, %v561
    %v565 = vmul.f32 %v551, %v558
    %v566 = vmul.f32 %v552, %v562
    %567 = vrot.lane.b32.xlu0 %v425, 111
    %v568 = vpop.permute.xlu0 %567
    %569 = vrot.lane.b32.xlu0 %v426, 111
    %v570 = vpop.permute.xlu0 %569
    %v571 = vsel %vm200, %v568, %v570
    %v572 = vsel %vm200, %v570, %v568
    %v573 = vld [vmem:[%s203] sm:$0x3]
    %v575 = vlaneseq
    %v576 = vshrl.u32 %v575, 7
    %v577 = vsub.s32 0, %v576
    %v578 = vrot.slane %v573, %v577
    %v579 = vlaneseq
    %v580 = vshrl.u32 %v579, 7
    %v581 = vsub.s32 1, %v580
    %v582 = vrot.slane %v573, %v581
    %v585 = vmul.f32 %v571, %v578
    %v586 = vmul.f32 %v572, %v582
    %v587 = vpack.c.bf16 %v465, %v445
    %v588 = vpack.c.bf16 %v466, %v446
    %v589 = vpack.c.bf16 %v505, %v485
    %v590 = vpack.c.bf16 %v506, %v486
    %v591 = vpack.c.bf16 %v525, %v425
    %v592 = vpack.c.bf16 %v526, %v426
    %v593 = vpack.c.bf16 %v565, %v545
    %v594 = vpack.c.bf16 %v566, %v546
    %v595 = vpack.c.bf16 %v585, %v585
    %v596 = vpack.c.bf16 %v586, %v586
    %v597 = vld [vmem:[%s1] sm:$0xf]
    %v598 = vld [vmem:[%s2] sm:$0xff]
    %600 = vset.pattern.permute.xlu0 0
    %601 = vperm.xlu0 %600, %v598
    %v602 = vpop.permute.xlu0 %601
    %v605 = vsel %vm235, %v597, 0
    %v608 = vsel %vm239, %v595, 0
    %v611 = vsel %vm239, %v596, 0
    %613 = vmatprep.subr.bf16.mxu0 %v588
    %614 = vmatpush1.bf16.msra.mxu0 %v587
    %615 = vmatprep.subr.bf16.mxu0 %v590
    %616 = vmatpush1.bf16.msra.mxu0 %v589
    %617 = vmatprep.subr.bf16.mxu0 %v592
    %618 = vmatpush1.bf16.msra.mxu0 %v591
    %619 = vmatprep.subr.bf16.mxu0 %v594
    %620 = vmatpush1.bf16.msra.mxu0 %v593
    %621 = vmatprep.subr.bf16.mxu0 %v611
    %622 = vmatpush1.bf16.msra.mxu0 %v608
    %623 = vmatprep.subr.bf16.mxu0 0
    %624 = vmatpush1.bf16.msra.mxu0 0
    %625 = vmatprep.subr.bf16.mxu0 0
    %626 = vmatpush1.bf16.msra.mxu0 0
    %627 = vmatprep.subr.bf16.mxu0 0
    %628 = vmatpush1.bf16.msra.mxu0 0
    %629 = vmatprep.subr.bf16.mxu0 0
    %630 = vmatpush1.bf16.msra.mxu0 0
    %631 = vmatprep.subr.bf16.mxu0 0
    %632 = vmatpush1.bf16.msra.mxu0 0
    %633 = vmatprep.subr.bf16.mxu0 0
    %634 = vmatpush1.bf16.msra.mxu0 0
    %635 = vmatprep.subr.bf16.mxu0 0
    %636 = vmatpush1.bf16.msra.mxu0 0
    %637 = vmatprep.subr.bf16.mxu0 0
    %638 = vmatpush1.bf16.msra.mxu0 0
    %639 = vmatprep.subr.bf16.mxu0 0
    %640 = vmatpush1.bf16.msra.mxu0 0
    %641 = vmatprep.subr.bf16.mxu0 0
    %642 = vmatpush1.bf16.msra.mxu0 0
    %643 = vmatprep.subr.bf16.mxu0 0
    %644 = vmatpush1.bf16.msra.mxu0 0
    %645 = vmatprep.mubr.bf16.mxu0 0
    %646 = vmatmul.mubr.bf16.gmra.mrb[0].mxu0 %v605
    %v647 = vpop.f32.mrb[0].mxu0
    %v648 = vadd.f32 %v602, %v647
    %v649 = vpop.f32.mrb[0].mxu0
    %v650 = vadd.f32 %v602, %v649
    %v651 = vpop.f32.mrb[0].mxu0
    %v652 = vpop.f32.mrb[0].mxu0
    %653 = vdwg.mxu0
    %v654 = vmax.f32 %v648, 0.0
    %v655 = vmax.f32 %v650, 0.0
    %656 = vrot.lane.b32.xlu0 %v654, 17
    %v657 = vpop.permute.xlu0 %656
    %658 = vrot.lane.b32.xlu0 %v655, 17
    %v659 = vpop.permute.xlu0 %658
    %v660 = vsel %vm47, %v657, %v659
    %v661 = vsel %vm47, %v659, %v657
    %v662 = vmul.f32 %v661, %v438
    %v663 = vmul.f32 %v660, %v442
    %664 = vrot.lane.b32.xlu0 %v654, 16
    %v665 = vpop.permute.xlu0 %664
    %666 = vrot.lane.b32.xlu0 %v655, 16
    %v667 = vpop.permute.xlu0 %666
    %v668 = vsel %vm68, %v665, %v667
    %v669 = vsel %vm68, %v667, %v665
    %v670 = vmul.f32 %v669, %v458
    %v671 = vmul.f32 %v668, %v462
    %672 = vrot.lane.b32.xlu0 %v654, 15
    %v673 = vpop.permute.xlu0 %672
    %674 = vrot.lane.b32.xlu0 %v655, 15
    %v675 = vpop.permute.xlu0 %674
    %v676 = vsel %vm90, %v673, %v675
    %v677 = vsel %vm90, %v675, %v673
    %v678 = vmul.f32 %v677, %v478
    %v679 = vmul.f32 %v676, %v482
    %680 = vrot.lane.b32.xlu0 %v654, 1
    %v681 = vpop.permute.xlu0 %680
    %682 = vrot.lane.b32.xlu0 %v655, 1
    %v683 = vpop.permute.xlu0 %682
    %v684 = vsel %vm112, %v681, %v683
    %v685 = vsel %vm112, %v683, %v681
    %v686 = vmul.f32 %v685, %v498
    %v687 = vmul.f32 %v684, %v502
    %688 = vrot.lane.b32.xlu0 %v654, 127
    %v689 = vpop.permute.xlu0 %688
    %690 = vrot.lane.b32.xlu0 %v655, 127
    %v691 = vpop.permute.xlu0 %690
    %v692 = vsel %vm134, %v689, %v691
    %v693 = vsel %vm134, %v691, %v689
    %v694 = vmul.f32 %v692, %v518
    %v695 = vmul.f32 %v693, %v522
    %696 = vrot.lane.b32.xlu0 %v654, 113
    %v697 = vpop.permute.xlu0 %696
    %698 = vrot.lane.b32.xlu0 %v655, 113
    %v699 = vpop.permute.xlu0 %698
    %v700 = vsel %vm156, %v697, %v699
    %v701 = vsel %vm156, %v699, %v697
    %v702 = vmul.f32 %v700, %v538
    %v703 = vmul.f32 %v701, %v542
    %704 = vrot.lane.b32.xlu0 %v654, 112
    %v705 = vpop.permute.xlu0 %704
    %706 = vrot.lane.b32.xlu0 %v655, 112
    %v707 = vpop.permute.xlu0 %706
    %v708 = vsel %vm178, %v705, %v707
    %v709 = vsel %vm178, %v707, %v705
    %v710 = vmul.f32 %v708, %v558
    %v711 = vmul.f32 %v709, %v562
    %712 = vrot.lane.b32.xlu0 %v654, 111
    %v713 = vpop.permute.xlu0 %712
    %714 = vrot.lane.b32.xlu0 %v655, 111
    %v715 = vpop.permute.xlu0 %714
    %v716 = vsel %vm200, %v713, %v715
    %v717 = vsel %vm200, %v715, %v713
    %v718 = vmul.f32 %v716, %v578
    %v719 = vmul.f32 %v717, %v582
    %v720 = vpack.c.bf16 %v670, %v662
    %v721 = vpack.c.bf16 %v671, %v663
    %v722 = vpack.c.bf16 %v686, %v678
    %v723 = vpack.c.bf16 %v687, %v679
    %v724 = vpack.c.bf16 %v694, %v654
    %v725 = vpack.c.bf16 %v695, %v655
    %v726 = vpack.c.bf16 %v710, %v702
    %v727 = vpack.c.bf16 %v711, %v703
    %v728 = vpack.c.bf16 %v718, %v718
    %v729 = vpack.c.bf16 %v719, %v719
    %v730 = vld [vmem:[%s3] sm:$0xf]
    %v731 = vld [vmem:[%s4] sm:$0xff]
    %733 = vset.pattern.permute.xlu0 0
    %734 = vperm.xlu0 %733, %v731
    %v735 = vpop.permute.xlu0 %734
    %v738 = vsel %vm235, %v730, 0
    %v741 = vsel %vm239, %v728, 0
    %v744 = vsel %vm239, %v729, 0
    %746 = vmatprep.subr.bf16.mxu0 %v721
    %747 = vmatpush1.bf16.msra.mxu0 %v720
    %748 = vmatprep.subr.bf16.mxu0 %v723
    %749 = vmatpush1.bf16.msra.mxu0 %v722
    %750 = vmatprep.subr.bf16.mxu0 %v725
    %751 = vmatpush1.bf16.msra.mxu0 %v724
    %752 = vmatprep.subr.bf16.mxu0 %v727
    %753 = vmatpush1.bf16.msra.mxu0 %v726
    %754 = vmatprep.subr.bf16.mxu0 %v744
    %755 = vmatpush1.bf16.msra.mxu0 %v741
    %756 = vmatprep.subr.bf16.mxu0 0
    %757 = vmatpush1.bf16.msra.mxu0 0
    %758 = vmatprep.subr.bf16.mxu0 0
    %759 = vmatpush1.bf16.msra.mxu0 0
    %760 = vmatprep.subr.bf16.mxu0 0
    %761 = vmatpush1.bf16.msra.mxu0 0
    %762 = vmatprep.subr.bf16.mxu0 0
    %763 = vmatpush1.bf16.msra.mxu0 0
    %764 = vmatprep.subr.bf16.mxu0 0
    %765 = vmatpush1.bf16.msra.mxu0 0
    %766 = vmatprep.subr.bf16.mxu0 0
    %767 = vmatpush1.bf16.msra.mxu0 0
    %768 = vmatprep.subr.bf16.mxu0 0
    %769 = vmatpush1.bf16.msra.mxu0 0
    %770 = vmatprep.subr.bf16.mxu0 0
    %771 = vmatpush1.bf16.msra.mxu0 0
    %772 = vmatprep.subr.bf16.mxu0 0
    %773 = vmatpush1.bf16.msra.mxu0 0
    %774 = vmatprep.subr.bf16.mxu0 0
    %775 = vmatpush1.bf16.msra.mxu0 0
    %776 = vmatprep.subr.bf16.mxu0 0
    %777 = vmatpush1.bf16.msra.mxu0 0
    %778 = vmatprep.mubr.bf16.mxu0 0
    %779 = vmatmul.mubr.bf16.gmra.mrb[0].mxu0 %v738
    %v780 = vpop.f32.mrb[0].mxu0
    %v781 = vadd.f32 %v735, %v780
    %v782 = vpop.f32.mrb[0].mxu0
    %v783 = vadd.f32 %v735, %v782
    %v784 = vpop.f32.mrb[0].mxu0
    %v785 = vpop.f32.mrb[0].mxu0
    %786 = vdwg.mxu0
    %v787 = vmax.f32 %v781, 0.0
    %v788 = vmax.f32 %v783, 0.0
    %s789 = scalar_lea.vmem [#allocation5], 16
    %790 = vst [vmem:[%s789] sm:$0xff] %v787
    %791 = vst [vmem:[%s789 + $0x8] sm:$0xff] %v788
    // Predicated region
    $region30: #{tpu_custom_call.1} parent=1 // pred_check
      _
    $region31: #{tpu_custom_call.1} parent=1 // pred_check_branch
      %793 = sbr.rel (0) target = $region33
    $region32: #{tpu_custom_call.1} parent=1 // pred_region
      %s795 = ssub.s32 512, 512
      %796 = vsyncadd [#allocation4], %s795
      %s797 = sshll.u32 [#allocation5], 4
      %s798 = int_to_ptr.vmem [resolvable:$true] %s797
      %803 = dma.vmem_to_hbm [thread:$0]  %s798, 512, %s6, [#allocation4], 256, 256, 16
    $region33: #{tpu_custom_call.1} parent=1 // pred_fallthru
      _
    // Predicated region
    $region34: #{tpu_custom_call.1} parent=1 // pred_check
      _
    $region35: #{tpu_custom_call.1} parent=1 // pred_check_branch
      %805 = sbr.rel (0) target = $region37
    $region36: #{tpu_custom_call.1} parent=1 // pred_region
      %806 = dma.done [#allocation4], 512
    $region37: #{tpu_custom_call.1} parent=1 // pred_fallthru
      _
    %807 = vsyncpa [#allocation3], 1
    %808 = vsyncpa [#allocation4], 1

</llo_original>
